<compile_context>
chip_gen: v5e
topology: v5e:2x2
jax: 0.10.0
libtpu: 0.0.40
codegen_flags: <defaults>
</compile_context>

<pallas_src>
import functools

import numpy as np
import jax
import jax.numpy as jnp
from jax import lax
from jax.experimental import pallas as pl
from jax.experimental.pallas import tpu as pltpu

NEG_SLOPE = 0.2
_PAD_MODE = {'reflect': 'reflect', 'replicate': 'edge', 'zero': 'constant'}


# ---------------------------------------------------------------------------
# Helpers
# ---------------------------------------------------------------------------
def _cpad(c):
    """Pad channels up to the bf16 sublane tile (16 rows)."""
    return ((c + 15) // 16) * 16


def _pick_block(r):
    """Largest lane block in {2048..128} that divides r (else whole axis)."""
    for c in (2048, 1024, 512, 256, 128):
        if r > c and r % c == 0:
            return c
    return r


def _cparams():
    # 32 MiB scoped VMEM: explicit (raises v5e's 16 MiB default, stays well
    # under v7x's 64 MiB physical); per-step blocks use only a few MiB.
    return pltpu.CompilerParams(dimension_semantics=("parallel",),
                                vmem_limit_bytes=32 * 1024 * 1024)


def _im2col(x, k, stride, pad, pad_type, c_pad, dtype):
    """x: (C, N, H, W) -> (k*k*c_pad, N*Ho*Wo) patches (wrapper-side plumbing).

    Row ordering is (kh, kw, c) with c zero-padded to c_pad per tap.
    """
    C, N, H, W = x.shape
    Ho = (H + 2 * pad - k) // stride + 1
    Wo = (W + 2 * pad - k) // stride + 1
    if pad > 0:
        if pad_type == 'reflect':
            assert H > pad and W > pad, 'reflect pad needs spatial dims > pad'
        xp = jnp.pad(x, ((0, 0), (0, 0), (pad, pad), (pad, pad)),
                     mode=_PAD_MODE[pad_type])
    else:
        xp = x
    taps = []
    for kh in range(k):
        for kw in range(k):
            t = xp[:, :, kh:kh + (Ho - 1) * stride + 1:stride,
                         kw:kw + (Wo - 1) * stride + 1:stride]
            t = t.reshape(C, N * Ho * Wo)
            if c_pad > C:
                t = jnp.pad(t, ((0, c_pad - C), (0, 0)))
            taps.append(t)
    return jnp.concatenate(taps, axis=0).astype(dtype), Ho, Wo


def _pool_windows(x):
    """x: (C, N, H, W) -> (9, C, N*Ho*Wo) zero-padded 3x3/stride-2 windows."""
    C, N, H, W = x.shape
    Ho = (H - 1) // 2 + 1
    Wo = (W - 1) // 2 + 1
    xp = jnp.pad(x, ((0, 0), (0, 0), (1, 1), (1, 1)))
    wins = []
    for kh in range(3):
        for kw in range(3):
            t = xp[:, :, kh:kh + 2 * (Ho - 1) + 1:2,
                         kw:kw + 2 * (Wo - 1) + 1:2]
            wins.append(t.reshape(1, C, N * Ho * Wo))
    return jnp.concatenate(wins, axis=0).astype(jnp.float32), Ho, Wo


def _pool_recip_row(N, H, W):
    """Exact f32 1/count row for AvgPool2d(3,2,1,count_include_pad=False)."""
    Ho = (H - 1) // 2 + 1
    Wo = (W - 1) // 2 + 1
    cnt = np.zeros((Ho, Wo), np.float32)
    for i in range(Ho):
        for j in range(Wo):
            c = 0
            for kh in range(3):
                for kw in range(3):
                    if 0 <= 2 * i + kh - 1 < H and 0 <= 2 * j + kw - 1 < W:
                        c += 1
            cnt[i, j] = 1.0 / c
    return np.tile(cnt.reshape(-1), N).reshape(1, N * Ho * Wo)


# ---------------------------------------------------------------------------
# Pallas kernels
# ---------------------------------------------------------------------------
def _apply_act(y, act):
    if act == 'lrelu':
        return jnp.where(y > 0, y, NEG_SLOPE * y)
    if act == 'relu':
        return jnp.maximum(y, 0.0)
    if act == 'tanh':
        return jnp.tanh(y)
    return y  # 'none'.  TODO(synk): 'prelu' / 'selu' not implemented.


def _conv_kernel(x_ref, w_ref, b_ref, o_ref, *, act):
    """One 4x4 Conv2dBlock: bf16 MXU matmul + f32 bias + activation."""
    acc = jnp.dot(w_ref[...], x_ref[...],
                  preferred_element_type=jnp.float32)      # (Cout, TR) f32
    acc = _apply_act(acc + b_ref[...], act)
    o_ref[...] = acc.astype(o_ref.dtype)


def _conv_head_kernel(x_ref, w_ref, b_ref, w1_ref, b1_ref, o_ref, *, act):
    """Last 4x4 Conv2dBlock fused with the final 1x1 conv (Cout=1).

    The f32 accumulator feeds a VPU multiply + sublane reduce directly
    (no bf16 round trip, no MXU for the 1-row projection).
    """
    acc = jnp.dot(w_ref[...], x_ref[...],
                  preferred_element_type=jnp.float32)      # (Cout, TR) f32
    acc = _apply_act(acc + b_ref[...], act)
    o_ref[...] = jnp.sum(w1_ref[...] * acc, axis=0, keepdims=True) + b1_ref[...]


def _pool_kernel(win_ref, recip_ref, o_ref):
    """AvgPool2d(3,2,1,count_include_pad=False): 9 f32 adds + 1/count mul."""
    acc = win_ref[0]
    for t in range(1, 9):
        acc = acc + win_ref[t]
    o_ref[...] = acc * recip_ref[...]


# ---------------------------------------------------------------------------
# Discriminator (parameters initialized deterministically in-script)
# ---------------------------------------------------------------------------
class Discriminator:
    """Multi-scale patch discriminator (forward pass only)."""

    def __init__(self, input_dim, params, key, compute_dtype=jnp.bfloat16):
        self.n_layer = params['n_layer']
        self.gan_type = params['gan_type']
        self.dim = params['dim']
        self.norm = params['norm']
        self.activ = params['activ']
        self.num_scales = params['num_scales']
        self.pad_type = params['pad_type']
        self.input_dim = input_dim
        self.compute_dtype = compute_dtype
        # In the reference PyTorch module, norm='sn' leaves Conv2dBlock.norm =
        # None, so 'sn' is numerically identical to 'none' -- same here.
        assert self.norm in ('none', 'sn')  # TODO(synk): 'bn' not implemented
        self.cnns = []
        for _ in range(self.num_scales):
            key, sub = jax.random.split(key)
            self.cnns.append(self._make_net(sub))
        self.packed = [self._pack_net(net) for net in self.cnns]

    # -- parameters (PyTorch Conv2d layout: (Cout, Cin, kh, kw)) -------------
    def _conv_params(self, key, cout, cin, k):
        k1, k2 = jax.random.split(key)
        w = 0.1 * jax.random.normal(k1, (cout, cin, k, k), jnp.float32)
        b = 0.1 * jax.random.normal(k2, (cout,), jnp.float32)
        return w, b

    def _make_net(self, key):
        layers = []
        dim = self.dim
        key, sub = jax.random.split(key)
        w, b = self._conv_params(sub, dim, self.input_dim, 4)
        layers.append(dict(w=w, b=b, stride=2, padding=1, activ=self.activ))
        for _ in range(self.n_layer - 1):
            key, sub = jax.random.split(key)
            w, b = self._conv_params(sub, dim * 2, dim, 4)
            layers.append(dict(w=w, b=b, stride=2, padding=1, activ=self.activ))
            dim *= 2
        key, sub = jax.random.split(key)
        w, b = self._conv_params(sub, 1, dim, 1)
        layers.append(dict(w=w, b=b, stride=1, padding=0, activ='none'))
        return layers

    # -- kernel-ready packed weights ------------------------------------------
    def _pack_conv(self, layer):
        w = np.asarray(layer['w'], np.float32)
        b = np.asarray(layer['b'], np.float32)
        cout, cin, k, _ = w.shape
        cp = _cpad(cin)
        wk = np.zeros((cout, k * k * cp), np.float32)
        for kh in range(k):
            for kw in range(k):
                base = (kh * k + kw) * cp
                wk[:, base:base + cin] = w[:, :, kh, kw]
        return dict(wk=jnp.asarray(wk, self.compute_dtype),
                    b=jnp.asarray(b.reshape(cout, 1), jnp.float32),
                    c_pad=cp, cout=cout, k=k,
                    stride=layer['stride'], pad=layer['padding'],
                    act=layer['activ'])

    def _pack_head(self, layer):
        w = np.asarray(layer['w'], np.float32)   # (1, Cin, 1, 1)
        b = np.asarray(layer['b'], np.float32)
        cin = w.shape[1]
        return dict(w1=jnp.asarray(w.reshape(1, cin).T, jnp.float32),
                    b1=jnp.asarray(b.reshape(1, 1), jnp.float32))

    def _pack_net(self, net):
        return dict(convs=[self._pack_conv(l) for l in net[:-1]],
                    head=self._pack_head(net[-1]))

    # -- per-layer Pallas calls ------------------------------------------------
    def _conv_block(self, h, layer):
        C, N, H, W = h.shape
        patches, Ho, Wo = _im2col(h, layer['k'], layer['stride'], layer['pad'],
                                  self.pad_type, layer['c_pad'],
                                  self.compute_dtype)
        K = patches.shape[0]
        R = N * Ho * Wo
        cout = layer['cout']
        tr = _pick_block(R)
        y2d = pl.pallas_call(
            functools.partial(_conv_kernel, act=layer['act']),
            grid=(R // tr,),
            in_specs=[pl.BlockSpec((K, tr), lambda j: (0, j)),
                      pl.BlockSpec((cout, K), lambda j: (0, 0)),
                      pl.BlockSpec((cout, 1), lambda j: (0, 0))],
            out_specs=pl.BlockSpec((cout, tr), lambda j: (0, j)),
            out_shape=jax.ShapeDtypeStruct((cout, R), jnp.float32),
            compiler_params=_cparams(),
        )(patches, layer['wk'], layer['b'])
        return y2d.reshape(cout, N, Ho, Wo)

    def _conv_head(self, h, layer, head):
        C, N, H, W = h.shape
        patches, Ho, Wo = _im2col(h, layer['k'], layer['stride'], layer['pad'],
                                  self.pad_type, layer['c_pad'],
                                  self.compute_dtype)
        K = patches.shape[0]
        R = N * Ho * Wo
        cout = layer['cout']
        tr = _pick_block(R)
        out2d = pl.pallas_call(
            functools.partial(_conv_head_kernel, act=layer['act']),
            grid=(R // tr,),
            in_specs=[pl.BlockSpec((K, tr), lambda j: (0, j)),
                      pl.BlockSpec((cout, K), lambda j: (0, 0)),
                      pl.BlockSpec((cout, 1), lambda j: (0, 0)),
                      pl.BlockSpec((cout, 1), lambda j: (0, 0)),
                      pl.BlockSpec((1, 1), lambda j: (0, 0))],
            out_specs=pl.BlockSpec((1, tr), lambda j: (0, j)),
            out_shape=jax.ShapeDtypeStruct((1, R), jnp.float32),
            compiler_params=_cparams(),
        )(patches, layer['wk'], layer['b'], head['w1'], head['b1'])
        return out2d, N, Ho, Wo

    def _avg_pool(self, x):
        C, N, H, W = x.shape
        win, Ho, Wo = _pool_windows(x)
        recip = jnp.asarray(_pool_recip_row(N, H, W), jnp.float32)
        R = N * Ho * Wo
        tr = _pick_block(R)
        p2d = pl.pallas_call(
            _pool_kernel,
            grid=(R // tr,),
            in_specs=[pl.BlockSpec((9, C, tr), lambda j: (0, 0, j)),
                      pl.BlockSpec((1, tr), lambda j: (0, j))],
            out_specs=pl.BlockSpec((C, tr), lambda j: (0, j)),
            out_shape=jax.ShapeDtypeStruct((C, R), jnp.float32),
            compiler_params=_cparams(),
        )(win, recip)
        return p2d.reshape(C, N, Ho, Wo)

    # -- forward ---------------------------------------------------------------
    def forward(self, x_nhwc):
        N, H, W, C = x_nhwc.shape
        assert C == self.input_dim
        # NHWC -> channels-first (C, N, H, W) f32 working layout.
        x = jnp.transpose(x_nhwc, (3, 0, 1, 2)).astype(jnp.float32)
        outputs = []
        for s in range(self.num_scales):
            convs = self.packed[s]['convs']
            head = self.packed[s]['head']
            h = x
            for layer in convs[:-1]:
                h = self._conv_block(h, layer)
            out2d, n_, ho, wo = self._conv_head(h, convs[-1], head)
            outputs.append(out2d.reshape(n_, ho, wo, 1))
            if s < self.num_scales - 1:
                x = self._avg_pool(x)
        return outputs


# ---------------------------------------------------------------------------
# Pure-JAX (f32) reference for the correctness check
# ---------------------------------------------------------------------------
def _ref_conv_block(x, w, b, stride, padding, pad_type, activation):
    if padding > 0:
        x = jnp.pad(x, ((0, 0), (padding, padding), (padding, padding), (0, 0)),
                    mode=_PAD_MODE[pad_type])
    w_hwio = jnp.transpose(w, (2, 3, 1, 0))
    y = lax.conv_general_dilated(x, w_hwio, (stride, stride), 'VALID',
                                 dimension_numbers=('NHWC', 'HWIO', 'NHWC'))
    y = y + b.reshape(1, 1, 1, -1)
    if activation == 'lrelu':
        y = jnp.where(y > 0, y, NEG_SLOPE * y)
    return y


def _ref_avgpool(x):
    pads = ((0, 0), (1, 1), (1, 1), (0, 0))
    sums = lax.reduce_window(x, 0.0, lax.add, (1, 3, 3, 1), (1, 2, 2, 1), pads)
    ones = jnp.ones((1, x.shape[1], x.shape[2], 1), x.dtype)
    cnt = lax.reduce_window(ones, 0.0, lax.add, (1, 3, 3, 1), (1, 2, 2, 1), pads)
    return sums / cnt


def _ref_forward(disc, x_nhwc):
    outputs = []
    x = x_nhwc
    for net in disc.cnns:
        h = x
        for layer in net:
            h = _ref_conv_block(h, layer['w'], layer['b'], layer['stride'],
                                layer['padding'], disc.pad_type, layer['activ'])
        outputs.append(h)
        x = _ref_avgpool(x)
    return outputs


# ---------------------------------------------------------------------------
if __name__ == "__main__":
    key = jax.random.PRNGKey(0)
    kx, kp = jax.random.split(key)

    params = dict(n_layer=2, gan_type='lsgan', dim=8, norm='none',
                  activ='lrelu', num_scales=2, pad_type='reflect')
    input_dim = 4
    N, H, W = 2, 16, 16

    # PyTorch-convention NCHW input -> NHWC for the wrapper.
    x_nchw = jax.random.normal(kx, (N, input_dim, H, W), jnp.float32)
    x_nhwc = jnp.transpose(x_nchw, (0, 2, 3, 1))

    disc = Discriminator(input_dim, params, kp)

    fwd = jax.jit(disc.forward)
    outs = jax.block_until_ready(fwd(x_nhwc))

    # Sanity check against a pure-JAX float32 reference (kernel uses bf16
    # MXU operands with f32 accumulation -> small rounding tolerance).
    refs = _ref_forward(disc, x_nhwc)
    for o, r in zip(outs, refs):
        assert o.shape == r.shape, (o.shape, r.shape)
        max_err = float(jnp.max(jnp.abs(o.astype(jnp.float32) - r)))
        assert max_err < 5e-2, f"mismatch: {max_err}"

    print("KERNEL_OK")
</pallas_src>

<mosaic_0001>
module attributes {stable_mosaic.version = 11 : i64} {
  func.func @_conv_kernel(%arg0: i32, %arg1: memref<256x128xbf16, #tpu.memory_space<vmem>>, %arg2: memref<8x256xbf16, #tpu.memory_space<vmem>>, %arg3: memref<8x1xf32, #tpu.memory_space<vmem>>, %arg4: memref<8x128xf32, #tpu.memory_space<vmem>>) attributes {dimension_semantics = [#tpu.dimension_semantics<parallel>], iteration_bounds = array<i64: 1>, scalar_prefetch = 0 : i64, scratch_operands = 0 : i64, tpu.core_type = #tpu.core_type<tc>, window_params = [{transform_indices = @transform_0, window_bounds = array<i64: 256, 128>}, {pipeline_mode = #tpu.pipeline_mode<synchronous>, transform_indices = @transform_1, window_bounds = array<i64: 8, 256>}, {pipeline_mode = #tpu.pipeline_mode<synchronous>, transform_indices = @transform_2, window_bounds = array<i64: 8, 1>}, {transform_indices = @transform_3, window_bounds = array<i64: 8, 128>}]} {
    %c0 = arith.constant 0 : index
    %c0_0 = arith.constant 0 : index
    %0 = vector.load %arg2[%c0, %c0_0] : memref<8x256xbf16, #tpu.memory_space<vmem>>, vector<8x256xbf16>
    %c0_1 = arith.constant 0 : index
    %c0_2 = arith.constant 0 : index
    %1 = vector.load %arg1[%c0_1, %c0_2] : memref<256x128xbf16, #tpu.memory_space<vmem>>, vector<256x128xbf16>
    %cst = arith.constant dense<0.000000e+00> : vector<8x128xf32>
    %2 = tpu.matmul %0, %1, %cst {dimension_numbers = #tpu.dot_dimension_numbers<[1], [0], [0], [1], [0, 0, 1, 1], [], []>} : vector<8x256xbf16>, vector<256x128xbf16>, vector<8x128xf32> -> vector<8x128xf32>
    %c0_3 = arith.constant 0 : index
    %c0_4 = arith.constant 0 : index
    %3 = vector.load %arg3[%c0_3, %c0_4] : memref<8x1xf32, #tpu.memory_space<vmem>>, vector<8x1xf32>
    %4 = vector.broadcast %3 : vector<8x1xf32> to vector<8x128xf32>
    %5 = arith.addf %2, %4 : vector<8x128xf32>
    %cst_5 = arith.constant 0.000000e+00 : f32
    %6 = vector.broadcast %cst_5 : f32 to vector<8x128xf32>
    %7 = arith.cmpf ogt, %5, %6 : vector<8x128xf32>
    %cst_6 = arith.constant 2.000000e-01 : f32
    %8 = vector.broadcast %cst_6 : f32 to vector<8x128xf32>
    %9 = arith.mulf %8, %5 : vector<8x128xf32>
    %10 = arith.select %7, %5, %9 : vector<8x128xi1>, vector<8x128xf32>
    %c0_7 = arith.constant 0 : index
    %c0_8 = arith.constant 0 : index
    %11 = vector.load %arg4[%c0_7, %c0_8] : memref<8x128xf32, #tpu.memory_space<vmem>>, vector<8x128xf32>
    tpu.vector_store %arg4[%c0_7, %c0_8], %10 {strides = array<i32>} : memref<8x128xf32, #tpu.memory_space<vmem>>, vector<8x128xf32>,
    return
  }
  func.func @transform_0(%arg0: i32) -> (i32, i32) {
    %c0_i32 = arith.constant 0 : i32
    %c0_i32_0 = arith.constant 0 : i32
    return %c0_i32, %arg0 : i32, i32
  }
  func.func @transform_1(%arg0: i32) -> (i32, i32) {
    %c0_i32 = arith.constant 0 : i32
    %c0_i32_0 = arith.constant 0 : i32
    %c0_i32_1 = arith.constant 0 : i32
    return %c0_i32, %c0_i32_0 : i32, i32
  }
  func.func @transform_2(%arg0: i32) -> (i32, i32) {
    %c0_i32 = arith.constant 0 : i32
    %c0_i32_0 = arith.constant 0 : i32
    %c0_i32_1 = arith.constant 0 : i32
    return %c0_i32, %c0_i32_0 : i32, i32
  }
  func.func @transform_3(%arg0: i32) -> (i32, i32) {
    %c0_i32 = arith.constant 0 : i32
    %c0_i32_0 = arith.constant 0 : i32
    return %c0_i32, %arg0 : i32, i32
  }
}

module attributes {stable_mosaic.version = 11 : i64} {
  func.func @_conv_head_kernel(%arg0: i32, %arg1: memref<256x32xbf16, #tpu.memory_space<vmem>>, %arg2: memref<16x256xbf16, #tpu.memory_space<vmem>>, %arg3: memref<16x1xf32, #tpu.memory_space<vmem>>, %arg4: memref<16x1xf32, #tpu.memory_space<vmem>>, %arg5: memref<1x1xf32, #tpu.memory_space<vmem>>, %arg6: memref<1x32xf32, #tpu.memory_space<vmem>>) attributes {dimension_semantics = [#tpu.dimension_semantics<parallel>], iteration_bounds = array<i64: 1>, scalar_prefetch = 0 : i64, scratch_operands = 0 : i64, tpu.core_type = #tpu.core_type<tc>, window_params = [{transform_indices = @transform_0, window_bounds = array<i64: 256, 32>}, {pipeline_mode = #tpu.pipeline_mode<synchronous>, transform_indices = @transform_1, window_bounds = array<i64: 16, 256>}, {pipeline_mode = #tpu.pipeline_mode<synchronous>, transform_indices = @transform_2, window_bounds = array<i64: 16, 1>}, {pipeline_mode = #tpu.pipeline_mode<synchronous>, transform_indices = @transform_3, window_bounds = array<i64: 16, 1>}, {pipeline_mode = #tpu.pipeline_mode<synchronous>, transform_indices = @transform_4, window_bounds = array<i64: 1, 1>}, {transform_indices = @transform_5, window_bounds = array<i64: 1, 32>}]} {
    %c0 = arith.constant 0 : index
    %c0_0 = arith.constant 0 : index
    %0 = vector.load %arg2[%c0, %c0_0] : memref<16x256xbf16, #tpu.memory_space<vmem>>, vector<16x256xbf16>
    %c0_1 = arith.constant 0 : index
    %c0_2 = arith.constant 0 : index
    %1 = vector.load %arg1[%c0_1, %c0_2] : memref<256x32xbf16, #tpu.memory_space<vmem>>, vector<256x32xbf16>
    %cst = arith.constant dense<0.000000e+00> : vector<16x32xf32>
    %2 = tpu.matmul %0, %1, %cst {dimension_numbers = #tpu.dot_dimension_numbers<[1], [0], [0], [1], [0, 0, 1, 1], [], []>} : vector<16x256xbf16>, vector<256x32xbf16>, vector<16x32xf32> -> vector<16x32xf32>
    %c0_3 = arith.constant 0 : index
    %c0_4 = arith.constant 0 : index
    %3 = vector.load %arg3[%c0_3, %c0_4] : memref<16x1xf32, #tpu.memory_space<vmem>>, vector<16x1xf32>
    %4 = vector.broadcast %3 : vector<16x1xf32> to vector<16x32xf32>
    %5 = arith.addf %2, %4 : vector<16x32xf32>
    %cst_5 = arith.constant 0.000000e+00 : f32
    %6 = vector.broadcast %cst_5 : f32 to vector<16x32xf32>
    %7 = arith.cmpf ogt, %5, %6 : vector<16x32xf32>
    %cst_6 = arith.constant 2.000000e-01 : f32
    %8 = vector.broadcast %cst_6 : f32 to vector<16x32xf32>
    %9 = arith.mulf %8, %5 : vector<16x32xf32>
    %10 = arith.select %7, %5, %9 : vector<16x32xi1>, vector<16x32xf32>
    %c0_7 = arith.constant 0 : index
    %c0_8 = arith.constant 0 : index
    %11 = vector.load %arg4[%c0_7, %c0_8] : memref<16x1xf32, #tpu.memory_space<vmem>>, vector<16x1xf32>
    %12 = vector.broadcast %11 : vector<16x1xf32> to vector<16x32xf32>
    %13 = arith.mulf %12, %10 : vector<16x32xf32>
    %cst_9 = arith.constant dense<0.000000e+00> : vector<32xf32>
    %14 = vector.multi_reduction <add>, %13, %cst_9 [0] : vector<16x32xf32> to vector<32xf32>
    %15 = vector.shape_cast %14 : vector<32xf32> to vector<1x32xf32>
    %c0_10 = arith.constant 0 : index
    %c0_11 = arith.constant 0 : index
    %16 = vector.load %arg5[%c0_10, %c0_11] : memref<1x1xf32, #tpu.memory_space<vmem>>, vector<1x1xf32>
    %17 = vector.broadcast %16 : vector<1x1xf32> to vector<1x32xf32>
    %18 = arith.addf %15, %17 : vector<1x32xf32>
    %c0_12 = arith.constant 0 : index
    %c0_13 = arith.constant 0 : index
    %19 = vector.load %arg6[%c0_12, %c0_13] : memref<1x32xf32, #tpu.memory_space<vmem>>, vector<1x32xf32>
    tpu.vector_store %arg6[%c0_12, %c0_13], %18 {strides = array<i32>} : memref<1x32xf32, #tpu.memory_space<vmem>>, vector<1x32xf32>,
    return
  }
  func.func @transform_0(%arg0: i32) -> (i32, i32) {
    %c0_i32 = arith.constant 0 : i32
    %c0_i32_0 = arith.constant 0 : i32
    return %c0_i32, %arg0 : i32, i32
  }
  func.func @transform_1(%arg0: i32) -> (i32, i32) {
    %c0_i32 = arith.constant 0 : i32
    %c0_i32_0 = arith.constant 0 : i32
    %c0_i32_1 = arith.constant 0 : i32
    return %c0_i32, %c0_i32_0 : i32, i32
  }
  func.func @transform_2(%arg0: i32) -> (i32, i32) {
    %c0_i32 = arith.constant 0 : i32
    %c0_i32_0 = arith.constant 0 : i32
    %c0_i32_1 = arith.constant 0 : i32
    return %c0_i32, %c0_i32_0 : i32, i32
  }
  func.func @transform_3(%arg0: i32) -> (i32, i32) {
    %c0_i32 = arith.constant 0 : i32
    %c0_i32_0 = arith.constant 0 : i32
    %c0_i32_1 = arith.constant 0 : i32
    return %c0_i32, %c0_i32_0 : i32, i32
  }
  func.func @transform_4(%arg0: i32) -> (i32, i32) {
    %c0_i32 = arith.constant 0 : i32
    %c0_i32_0 = arith.constant 0 : i32
    %c0_i32_1 = arith.constant 0 : i32
    return %c0_i32, %c0_i32_0 : i32, i32
  }
  func.func @transform_5(%arg0: i32) -> (i32, i32) {
    %c0_i32 = arith.constant 0 : i32
    %c0_i32_0 = arith.constant 0 : i32
    return %c0_i32, %arg0 : i32, i32
  }
}

module attributes {stable_mosaic.version = 11 : i64} {
  func.func @_pool_kernel(%arg0: i32, %arg1: memref<9x4x128xf32, #tpu.memory_space<vmem>>, %arg2: memref<1x128xf32, #tpu.memory_space<vmem>>, %arg3: memref<4x128xf32, #tpu.memory_space<vmem>>) attributes {dimension_semantics = [#tpu.dimension_semantics<parallel>], iteration_bounds = array<i64: 1>, scalar_prefetch = 0 : i64, scratch_operands = 0 : i64, tpu.core_type = #tpu.core_type<tc>, window_params = [{transform_indices = @transform_0, window_bounds = array<i64: 9, 4, 128>}, {transform_indices = @transform_1, window_bounds = array<i64: 1, 128>}, {transform_indices = @transform_2, window_bounds = array<i64: 4, 128>}]} {
    %c0 = arith.constant 0 : index
    %c0_0 = arith.constant 0 : index
    %c0_1 = arith.constant 0 : index
    %0 = vector.load %arg1[%c0, %c0_0, %c0_1] : memref<9x4x128xf32, #tpu.memory_space<vmem>>, vector<1x4x128xf32>
    %1 = vector.shape_cast %0 : vector<1x4x128xf32> to vector<4x128xf32>
    %c1 = arith.constant 1 : index
    %c0_2 = arith.constant 0 : index
    %c0_3 = arith.constant 0 : index
    %2 = vector.load %arg1[%c1, %c0_2, %c0_3] : memref<9x4x128xf32, #tpu.memory_space<vmem>>, vector<1x4x128xf32>
    %3 = vector.shape_cast %2 : vector<1x4x128xf32> to vector<4x128xf32>
    %4 = arith.addf %1, %3 : vector<4x128xf32>
    %c2 = arith.constant 2 : index
    %c0_4 = arith.constant 0 : index
    %c0_5 = arith.constant 0 : index
    %5 = vector.load %arg1[%c2, %c0_4, %c0_5] : memref<9x4x128xf32, #tpu.memory_space<vmem>>, vector<1x4x128xf32>
    %6 = vector.shape_cast %5 : vector<1x4x128xf32> to vector<4x128xf32>
    %7 = arith.addf %4, %6 : vector<4x128xf32>
    %c3 = arith.constant 3 : index
    %c0_6 = arith.constant 0 : index
    %c0_7 = arith.constant 0 : index
    %8 = vector.load %arg1[%c3, %c0_6, %c0_7] : memref<9x4x128xf32, #tpu.memory_space<vmem>>, vector<1x4x128xf32>
    %9 = vector.shape_cast %8 : vector<1x4x128xf32> to vector<4x128xf32>
    %10 = arith.addf %7, %9 : vector<4x128xf32>
    %c4 = arith.constant 4 : index
    %c0_8 = arith.constant 0 : index
    %c0_9 = arith.constant 0 : index
    %11 = vector.load %arg1[%c4, %c0_8, %c0_9] : memref<9x4x128xf32, #tpu.memory_space<vmem>>, vector<1x4x128xf32>
    %12 = vector.shape_cast %11 : vector<1x4x128xf32> to vector<4x128xf32>
    %13 = arith.addf %10, %12 : vector<4x128xf32>
    %c5 = arith.constant 5 : index
    %c0_10 = arith.constant 0 : index
    %c0_11 = arith.constant 0 : index
    %14 = vector.load %arg1[%c5, %c0_10, %c0_11] : memref<9x4x128xf32, #tpu.memory_space<vmem>>, vector<1x4x128xf32>
    %15 = vector.shape_cast %14 : vector<1x4x128xf32> to vector<4x128xf32>
    %16 = arith.addf %13, %15 : vector<4x128xf32>
    %c6 = arith.constant 6 : index
    %c0_12 = arith.constant 0 : index
    %c0_13 = arith.constant 0 : index
    %17 = vector.load %arg1[%c6, %c0_12, %c0_13] : memref<9x4x128xf32, #tpu.memory_space<vmem>>, vector<1x4x128xf32>
    %18 = vector.shape_cast %17 : vector<1x4x128xf32> to vector<4x128xf32>
    %19 = arith.addf %16, %18 : vector<4x128xf32>
    %c7 = arith.constant 7 : index
    %c0_14 = arith.constant 0 : index
    %c0_15 = arith.constant 0 : index
    %20 = vector.load %arg1[%c7, %c0_14, %c0_15] : memref<9x4x128xf32, #tpu.memory_space<vmem>>, vector<1x4x128xf32>
    %21 = vector.shape_cast %20 : vector<1x4x128xf32> to vector<4x128xf32>
    %22 = arith.addf %19, %21 : vector<4x128xf32>
    %c8 = arith.constant 8 : index
    %c0_16 = arith.constant 0 : index
    %c0_17 = arith.constant 0 : index
    %23 = vector.load %arg1[%c8, %c0_16, %c0_17] : memref<9x4x128xf32, #tpu.memory_space<vmem>>, vector<1x4x128xf32>
    %24 = vector.shape_cast %23 : vector<1x4x128xf32> to vector<4x128xf32>
    %25 = arith.addf %22, %24 : vector<4x128xf32>
    %c0_18 = arith.constant 0 : index
    %c0_19 = arith.constant 0 : index
    %26 = vector.load %arg2[%c0_18, %c0_19] : memref<1x128xf32, #tpu.memory_space<vmem>>, vector<1x128xf32>
    %27 = vector.broadcast %26 : vector<1x128xf32> to vector<4x128xf32>
    %28 = arith.mulf %25, %27 : vector<4x128xf32>
    %c0_20 = arith.constant 0 : index
    %c0_21 = arith.constant 0 : index
    %29 = vector.load %arg3[%c0_20, %c0_21] : memref<4x128xf32, #tpu.memory_space<vmem>>, vector<4x128xf32>
    tpu.vector_store %arg3[%c0_20, %c0_21], %28 {strides = array<i32>} : memref<4x128xf32, #tpu.memory_space<vmem>>, vector<4x128xf32>,
    return
  }
  func.func @transform_0(%arg0: i32) -> (i32, i32, i32) {
    %c0_i32 = arith.constant 0 : i32
    %c0_i32_0 = arith.constant 0 : i32
    %c0_i32_1 = arith.constant 0 : i32
    return %c0_i32, %c0_i32_0, %arg0 : i32, i32, i32
  }
  func.func @transform_1(%arg0: i32) -> (i32, i32) {
    %c0_i32 = arith.constant 0 : i32
    %c0_i32_0 = arith.constant 0 : i32
    return %c0_i32, %arg0 : i32, i32
  }
  func.func @transform_2(%arg0: i32) -> (i32, i32) {
    %c0_i32 = arith.constant 0 : i32
    %c0_i32_0 = arith.constant 0 : i32
    return %c0_i32, %arg0 : i32, i32
  }
}

module attributes {stable_mosaic.version = 11 : i64} {
  func.func @_conv_kernel(%arg0: i32, %arg1: memref<256x32xbf16, #tpu.memory_space<vmem>>, %arg2: memref<8x256xbf16, #tpu.memory_space<vmem>>, %arg3: memref<8x1xf32, #tpu.memory_space<vmem>>, %arg4: memref<8x32xf32, #tpu.memory_space<vmem>>) attributes {dimension_semantics = [#tpu.dimension_semantics<parallel>], iteration_bounds = array<i64: 1>, scalar_prefetch = 0 : i64, scratch_operands = 0 : i64, tpu.core_type = #tpu.core_type<tc>, window_params = [{transform_indices = @transform_0, window_bounds = array<i64: 256, 32>}, {pipeline_mode = #tpu.pipeline_mode<synchronous>, transform_indices = @transform_1, window_bounds = array<i64: 8, 256>}, {pipeline_mode = #tpu.pipeline_mode<synchronous>, transform_indices = @transform_2, window_bounds = array<i64: 8, 1>}, {transform_indices = @transform_3, window_bounds = array<i64: 8, 32>}]} {
    %c0 = arith.constant 0 : index
    %c0_0 = arith.constant 0 : index
    %0 = vector.load %arg2[%c0, %c0_0] : memref<8x256xbf16, #tpu.memory_space<vmem>>, vector<8x256xbf16>
    %c0_1 = arith.constant 0 : index
    %c0_2 = arith.constant 0 : index
    %1 = vector.load %arg1[%c0_1, %c0_2] : memref<256x32xbf16, #tpu.memory_space<vmem>>, vector<256x32xbf16>
    %cst = arith.constant dense<0.000000e+00> : vector<8x32xf32>
    %2 = tpu.matmul %0, %1, %cst {dimension_numbers = #tpu.dot_dimension_numbers<[1], [0], [0], [1], [0, 0, 1, 1], [], []>} : vector<8x256xbf16>, vector<256x32xbf16>, vector<8x32xf32> -> vector<8x32xf32>
    %c0_3 = arith.constant 0 : index
    %c0_4 = arith.constant 0 : index
    %3 = vector.load %arg3[%c0_3, %c0_4] : memref<8x1xf32, #tpu.memory_space<vmem>>, vector<8x1xf32>
    %4 = vector.broadcast %3 : vector<8x1xf32> to vector<8x32xf32>
    %5 = arith.addf %2, %4 : vector<8x32xf32>
    %cst_5 = arith.constant 0.000000e+00 : f32
    %6 = vector.broadcast %cst_5 : f32 to vector<8x32xf32>
    %7 = arith.cmpf ogt, %5, %6 : vector<8x32xf32>
    %cst_6 = arith.constant 2.000000e-01 : f32
    %8 = vector.broadcast %cst_6 : f32 to vector<8x32xf32>
    %9 = arith.mulf %8, %5 : vector<8x32xf32>
    %10 = arith.select %7, %5, %9 : vector<8x32xi1>, vector<8x32xf32>
    %c0_7 = arith.constant 0 : index
    %c0_8 = arith.constant 0 : index
    %11 = vector.load %arg4[%c0_7, %c0_8] : memref<8x32xf32, #tpu.memory_space<vmem>>, vector<8x32xf32>
    tpu.vector_store %arg4[%c0_7, %c0_8], %10 {strides = array<i32>} : memref<8x32xf32, #tpu.memory_space<vmem>>, vector<8x32xf32>,
    return
  }
  func.func @transform_0(%arg0: i32) -> (i32, i32) {
    %c0_i32 = arith.constant 0 : i32
    %c0_i32_0 = arith.constant 0 : i32
    return %c0_i32, %arg0 : i32, i32
  }
  func.func @transform_1(%arg0: i32) -> (i32, i32) {
    %c0_i32 = arith.constant 0 : i32
    %c0_i32_0 = arith.constant 0 : i32
    %c0_i32_1 = arith.constant 0 : i32
    return %c0_i32, %c0_i32_0 : i32, i32
  }
  func.func @transform_2(%arg0: i32) -> (i32, i32) {
    %c0_i32 = arith.constant 0 : i32
    %c0_i32_0 = arith.constant 0 : i32
    %c0_i32_1 = arith.constant 0 : i32
    return %c0_i32, %c0_i32_0 : i32, i32
  }
  func.func @transform_3(%arg0: i32) -> (i32, i32) {
    %c0_i32 = arith.constant 0 : i32
    %c0_i32_0 = arith.constant 0 : i32
    return %c0_i32, %arg0 : i32, i32
  }
}

module attributes {stable_mosaic.version = 11 : i64} {
  func.func @_conv_head_kernel(%arg0: i32, %arg1: memref<256x8xbf16, #tpu.memory_space<vmem>>, %arg2: memref<16x256xbf16, #tpu.memory_space<vmem>>, %arg3: memref<16x1xf32, #tpu.memory_space<vmem>>, %arg4: memref<16x1xf32, #tpu.memory_space<vmem>>, %arg5: memref<1x1xf32, #tpu.memory_space<vmem>>, %arg6: memref<1x8xf32, #tpu.memory_space<vmem>>) attributes {dimension_semantics = [#tpu.dimension_semantics<parallel>], iteration_bounds = array<i64: 1>, scalar_prefetch = 0 : i64, scratch_operands = 0 : i64, tpu.core_type = #tpu.core_type<tc>, window_params = [{transform_indices = @transform_0, window_bounds = array<i64: 256, 8>}, {pipeline_mode = #tpu.pipeline_mode<synchronous>, transform_indices = @transform_1, window_bounds = array<i64: 16, 256>}, {pipeline_mode = #tpu.pipeline_mode<synchronous>, transform_indices = @transform_2, window_bounds = array<i64: 16, 1>}, {pipeline_mode = #tpu.pipeline_mode<synchronous>, transform_indices = @transform_3, window_bounds = array<i64: 16, 1>}, {pipeline_mode = #tpu.pipeline_mode<synchronous>, transform_indices = @transform_4, window_bounds = array<i64: 1, 1>}, {transform_indices = @transform_5, window_bounds = array<i64: 1, 8>}]} {
    %c0 = arith.constant 0 : index
    %c0_0 = arith.constant 0 : index
    %0 = vector.load %arg2[%c0, %c0_0] : memref<16x256xbf16, #tpu.memory_space<vmem>>, vector<16x256xbf16>
    %c0_1 = arith.constant 0 : index
    %c0_2 = arith.constant 0 : index
    %1 = vector.load %arg1[%c0_1, %c0_2] : memref<256x8xbf16, #tpu.memory_space<vmem>>, vector<256x8xbf16>
    %cst = arith.constant dense<0.000000e+00> : vector<16x8xf32>
    %2 = tpu.matmul %0, %1, %cst {dimension_numbers = #tpu.dot_dimension_numbers<[1], [0], [0], [1], [0, 0, 1, 1], [], []>} : vector<16x256xbf16>, vector<256x8xbf16>, vector<16x8xf32> -> vector<16x8xf32>
    %c0_3 = arith.constant 0 : index
    %c0_4 = arith.constant 0 : index
    %3 = vector.load %arg3[%c0_3, %c0_4] : memref<16x1xf32, #tpu.memory_space<vmem>>, vector<16x1xf32>
    %4 = vector.broadcast %3 : vector<16x1xf32> to vector<16x8xf32>
    %5 = arith.addf %2, %4 : vector<16x8xf32>
    %cst_5 = arith.constant 0.000000e+00 : f32
    %6 = vector.broadcast %cst_5 : f32 to vector<16x8xf32>
    %7 = arith.cmpf ogt, %5, %6 : vector<16x8xf32>
    %cst_6 = arith.constant 2.000000e-01 : f32
    %8 = vector.broadcast %cst_6 : f32 to vector<16x8xf32>
    %9 = arith.mulf %8, %5 : vector<16x8xf32>
    %10 = arith.select %7, %5, %9 : vector<16x8xi1>, vector<16x8xf32>
    %c0_7 = arith.constant 0 : index
    %c0_8 = arith.constant 0 : index
    %11 = vector.load %arg4[%c0_7, %c0_8] : memref<16x1xf32, #tpu.memory_space<vmem>>, vector<16x1xf32>
    %12 = vector.broadcast %11 : vector<16x1xf32> to vector<16x8xf32>
    %13 = arith.mulf %12, %10 : vector<16x8xf32>
    %cst_9 = arith.constant dense<0.000000e+00> : vector<8xf32>
    %14 = vector.multi_reduction <add>, %13, %cst_9 [0] : vector<16x8xf32> to vector<8xf32>
    %15 = vector.shape_cast %14 : vector<8xf32> to vector<1x8xf32>
    %c0_10 = arith.constant 0 : index
    %c0_11 = arith.constant 0 : index
    %16 = vector.load %arg5[%c0_10, %c0_11] : memref<1x1xf32, #tpu.memory_space<vmem>>, vector<1x1xf32>
    %17 = vector.broadcast %16 : vector<1x1xf32> to vector<1x8xf32>
    %18 = arith.addf %15, %17 : vector<1x8xf32>
    %c0_12 = arith.constant 0 : index
    %c0_13 = arith.constant 0 : index
    %19 = vector.load %arg6[%c0_12, %c0_13] : memref<1x8xf32, #tpu.memory_space<vmem>>, vector<1x8xf32>
    tpu.vector_store %arg6[%c0_12, %c0_13], %18 {strides = array<i32>} : memref<1x8xf32, #tpu.memory_space<vmem>>, vector<1x8xf32>,
    return
  }
  func.func @transform_0(%arg0: i32) -> (i32, i32) {
    %c0_i32 = arith.constant 0 : i32
    %c0_i32_0 = arith.constant 0 : i32
    return %c0_i32, %arg0 : i32, i32
  }
  func.func @transform_1(%arg0: i32) -> (i32, i32) {
    %c0_i32 = arith.constant 0 : i32
    %c0_i32_0 = arith.constant 0 : i32
    %c0_i32_1 = arith.constant 0 : i32
    return %c0_i32, %c0_i32_0 : i32, i32
  }
  func.func @transform_2(%arg0: i32) -> (i32, i32) {
    %c0_i32 = arith.constant 0 : i32
    %c0_i32_0 = arith.constant 0 : i32
    %c0_i32_1 = arith.constant 0 : i32
    return %c0_i32, %c0_i32_0 : i32, i32
  }
  func.func @transform_3(%arg0: i32) -> (i32, i32) {
    %c0_i32 = arith.constant 0 : i32
    %c0_i32_0 = arith.constant 0 : i32
    %c0_i32_1 = arith.constant 0 : i32
    return %c0_i32, %c0_i32_0 : i32, i32
  }
  func.func @transform_4(%arg0: i32) -> (i32, i32) {
    %c0_i32 = arith.constant 0 : i32
    %c0_i32_0 = arith.constant 0 : i32
    %c0_i32_1 = arith.constant 0 : i32
    return %c0_i32, %c0_i32_0 : i32, i32
  }
  func.func @transform_5(%arg0: i32) -> (i32, i32) {
    %c0_i32 = arith.constant 0 : i32
    %c0_i32_0 = arith.constant 0 : i32
    return %c0_i32, %arg0 : i32, i32
  }
}

</mosaic_0001>

<llo_original>
// kernel: forward.5
$region0: #{forward.5}
  #allocation0 [shape = 'u32[]', space=smem, size = 0x4, offset = 0x4, fixed_abs, tag = 'smem constant byte address 0x4 - core index']
  #allocation1 [shape = 'u32[72,128]{1,0:T(1,128)}', space=vmem, size = 0x9000, scoped, tag = 'internal scratch']
  %s0 = inlined_call_operand.vmem [shape: bf16[256,128], index: 0, kind: input, shape index: {}]
  %s1 = inlined_call_operand.vmem [shape: bf16[8,256], index: 1, kind: input, shape index: {}]
  %s2 = inlined_call_operand.vmem [shape: f32[8,1], index: 2, kind: input, shape index: {}]
  %s3 = inlined_call_operand.vmem [shape: f32[8,128], index: 3, kind: output, shape index: {}]
  %s4 = sld [smem:[#allocation0]]
  $region22: #{forward.5} parent=0
    _
  %s6 = ssub.s32 1, %s4
  %s7 = scalar_select 0, %s6, %s4
  // Predicated region
  $region2: #{forward.5} parent=0 // pred_check
    _
  $region3: #{forward.5} parent=0 // pred_check_branch
    %9 = sbr.rel (0) target = $region5
  $region4: #{forward.5} parent=0 // pred_region
    _
  $region5: #{forward.5} parent=0 // pred_fallthru
    _
  // Predicated region
  $region6: #{forward.5} parent=0 // pred_check
    _
  $region7: #{forward.5} parent=0 // pred_check_branch
    %11 = sbr.rel (0) target = $region9
  $region8: #{forward.5} parent=0 // pred_region
    _
  $region9: #{forward.5} parent=0 // pred_fallthru
    _
  // Predicated region
  $region10: #{forward.5} parent=0 // pred_check
    _
  $region11: #{forward.5} parent=0 // pred_check_branch
    %13 = sbr.rel (0) target = $region13
  $region12: #{forward.5} parent=0 // pred_region
    _
  $region13: #{forward.5} parent=0 // pred_fallthru
    _
  %v14 = vld [vmem:[%s1] sm:$0xff]
  %v15 = vld [vmem:[%s0] sm:$0xf]
  %v16 = vld [vmem:[%s0 + $0x4] sm:$0xf]
  %v17 = vld [vmem:[%s0 + $0x8] sm:$0xf]
  %v18 = vld [vmem:[%s0 + $0xc] sm:$0xf]
  %v19 = vld [vmem:[%s0 + $0x10] sm:$0xf]
  %v20 = vld [vmem:[%s0 + $0x14] sm:$0xf]
  %v21 = vld [vmem:[%s0 + $0x18] sm:$0xf]
  %v22 = vld [vmem:[%s0 + $0x1c] sm:$0xf]
  %v23 = vld [vmem:[%s0 + $0x20] sm:$0xf]
  %v24 = vld [vmem:[%s0 + $0x24] sm:$0xf]
  %v25 = vld [vmem:[%s0 + $0x28] sm:$0xf]
  %v26 = vld [vmem:[%s0 + $0x2c] sm:$0xf]
  %v27 = vld [vmem:[%s0 + $0x30] sm:$0xf]
  %v28 = vld [vmem:[%s0 + $0x34] sm:$0xf]
  %v29 = vld [vmem:[%s0 + $0x38] sm:$0xf]
  %v30 = vld [vmem:[%s0 + $0x3c] sm:$0xf]
  %v31 = vld [vmem:[%s0 + $0x40] sm:$0xf]
  %v32 = vld [vmem:[%s0 + $0x44] sm:$0xf]
  %v33 = vld [vmem:[%s0 + $0x48] sm:$0xf]
  %v34 = vld [vmem:[%s0 + $0x4c] sm:$0xf]
  %v35 = vld [vmem:[%s0 + $0x50] sm:$0xf]
  %v36 = vld [vmem:[%s0 + $0x54] sm:$0xf]
  %v37 = vld [vmem:[%s0 + $0x58] sm:$0xf]
  %v38 = vld [vmem:[%s0 + $0x5c] sm:$0xf]
  %v39 = vld [vmem:[%s0 + $0x60] sm:$0xf]
  %v40 = vld [vmem:[%s0 + $0x64] sm:$0xf]
  %v41 = vld [vmem:[%s0 + $0x68] sm:$0xf]
  %v42 = vld [vmem:[%s0 + $0x6c] sm:$0xf]
  %v43 = vld [vmem:[%s0 + $0x70] sm:$0xf]
  %v44 = vld [vmem:[%s0 + $0x74] sm:$0xf]
  %v45 = vld [vmem:[%s0 + $0x78] sm:$0xf]
  %v46 = vld [vmem:[%s0 + $0x7c] sm:$0xf]
  %v47 = vld [vmem:[%s2] sm:$0xff]
  %49 = vset.pattern.permute.xlu0 0
  %50 = vperm.xlu0 %49, %v47
  %v51 = vpop.permute.xlu0 %50
  %v54 = vunpack.c.l.b16 %v14
  %v55 = vunpack.c.h.b16 %v14
  %v56 = vpack.c.b16 %v54, %v54
  %v57 = vpack.c.b16 %v55, %v55
  %v92 = vunpack.c.l.b16 %v15
  %v93 = vunpack.c.l.b16 %v16
  %v94 = vunpack.c.l.b16 %v17
  %v95 = vunpack.c.l.b16 %v18
  %v96 = vunpack.c.l.b16 %v19
  %v97 = vunpack.c.l.b16 %v20
  %v98 = vunpack.c.l.b16 %v21
  %v99 = vunpack.c.l.b16 %v22
  %v100 = vunpack.c.l.b16 %v23
  %v101 = vunpack.c.l.b16 %v24
  %v102 = vunpack.c.l.b16 %v25
  %v103 = vunpack.c.l.b16 %v26
  %v104 = vunpack.c.l.b16 %v27
  %v105 = vunpack.c.l.b16 %v28
  %v106 = vunpack.c.l.b16 %v29
  %v107 = vunpack.c.l.b16 %v30
  %v108 = vunpack.c.l.b16 %v31
  %v109 = vunpack.c.l.b16 %v32
  %v110 = vunpack.c.l.b16 %v33
  %v111 = vunpack.c.l.b16 %v34
  %v112 = vunpack.c.l.b16 %v35
  %v113 = vunpack.c.l.b16 %v36
  %v114 = vunpack.c.l.b16 %v37
  %v115 = vunpack.c.l.b16 %v38
  %v116 = vunpack.c.l.b16 %v39
  %v117 = vunpack.c.l.b16 %v40
  %v118 = vunpack.c.l.b16 %v41
  %v119 = vunpack.c.l.b16 %v42
  %v120 = vunpack.c.l.b16 %v43
  %v121 = vunpack.c.l.b16 %v44
  %v122 = vunpack.c.l.b16 %v45
  %v123 = vunpack.c.l.b16 %v46
  %v124 = vpack.c.b16 %v93, %v92
  %v125 = vpack.c.b16 %v95, %v94
  %v126 = vpack.c.b16 %v97, %v96
  %v127 = vpack.c.b16 %v99, %v98
  %v128 = vpack.c.b16 %v101, %v100
  %v129 = vpack.c.b16 %v103, %v102
  %v130 = vpack.c.b16 %v105, %v104
  %v131 = vpack.c.b16 %v107, %v106
  %v132 = vpack.c.b16 %v109, %v108
  %v133 = vpack.c.b16 %v111, %v110
  %v134 = vpack.c.b16 %v113, %v112
  %v135 = vpack.c.b16 %v115, %v114
  %v136 = vpack.c.b16 %v117, %v116
  %v137 = vpack.c.b16 %v119, %v118
  %v138 = vpack.c.b16 %v121, %v120
  %v139 = vpack.c.b16 %v123, %v122
  %156 = vmatpush.bf16.msra.mxu0 %v131
  %157 = vmatpush.bf16.msra.mxu0 %v130
  %158 = vmatpush.bf16.msra.mxu0 %v129
  %159 = vmatpush.bf16.msra.mxu0 %v128
  %160 = vmatpush.bf16.msra.mxu0 %v127
  %161 = vmatpush.bf16.msra.mxu0 %v126
  %162 = vmatpush.bf16.msra.mxu0 %v125
  %163 = vmatpush.bf16.msra.mxu0 %v124
  %164 = vmatmul.bf16.gmra.mxu0 %v56
  %v165 = vpop.f32.mrf.mxu0
  %v166 = vadd.f32 %v51, %v165
  %v167 = vpop.f32.mrf.mxu0
  %168 = vdwg.mxu0
  %169 = vmatpush.bf16.msra.mxu0 %v139
  %170 = vmatpush.bf16.msra.mxu0 %v138
  %171 = vmatpush.bf16.msra.mxu0 %v137
  %172 = vmatpush.bf16.msra.mxu0 %v136
  %173 = vmatpush.bf16.msra.mxu0 %v135
  %174 = vmatpush.bf16.msra.mxu0 %v134
  %175 = vmatpush.bf16.msra.mxu0 %v133
  %176 = vmatpush.bf16.msra.mxu0 %v132
  %177 = vmatmul.bf16.gmra.mxu0 %v57
  %v178 = vpop.f32.mrf.mxu0
  %v179 = vadd.f32 %v166, %v178
  %v180 = vpop.f32.mrf.mxu0
  %181 = vdwg.mxu0
  %vm182 = vcmp.gt.f32.partialorder %v179, 0.0
  %v183 = vmul.f32 %v179, 0.2
  %v184 = vsel %vm182, %v179, %v183
  %185 = vst [vmem:[%s3] sm:$0xff] %v184
  // Predicated region
  $region14: #{forward.5} parent=0 // pred_check
    _
  $region15: #{forward.5} parent=0 // pred_check_branch
    %187 = sbr.rel (0) target = $region17
  $region16: #{forward.5} parent=0 // pred_region
    _
  $region17: #{forward.5} parent=0 // pred_fallthru
    _
  // Predicated region
  $region18: #{forward.5} parent=0 // pred_check
    _
  $region19: #{forward.5} parent=0 // pred_check_branch
    %189 = sbr.rel (0) target = $region21
  $region20: #{forward.5} parent=0 // pred_region
    _
  $region21: #{forward.5} parent=0 // pred_fallthru
    _

// kernel: forward.6
$region0: #{forward.6}
  #allocation0 [shape = 'u32[]', space=smem, size = 0x4, offset = 0x4, fixed_abs, tag = 'smem constant byte address 0x4 - core index']
  #allocation1 [shape = 'u32[72,128]{1,0:T(1,128)}', space=vmem, size = 0x9000, scoped, tag = 'internal scratch']
  #allocation2 [shape = 'f32[1,1]{1,0:T(1,128)S(1)}', space=vmem, size = 0x200, scoped, tag = 'scoped memory for forward.6']
  %s0 = inlined_call_operand.vmem [shape: bf16[256,32], index: 0, kind: input, shape index: {}]
  %s1 = inlined_call_operand.vmem [shape: bf16[16,256], index: 1, kind: input, shape index: {}]
  %s2 = inlined_call_operand.vmem [shape: f32[16,1], index: 2, kind: input, shape index: {}]
  %s3 = inlined_call_operand.vmem [shape: f32[16,1], index: 3, kind: input, shape index: {}]
  %s4 = inlined_call_operand.<no memory space> [shape: f32[1,1], index: 4, kind: input, shape index: {}]
  %s5 = inlined_call_operand.vmem [shape: f32[1,32], index: 5, kind: output, shape index: {}]
  %s6 = sld [smem:[#allocation0]]
  $region30: #{forward.6} parent=0
    _
  %s8 = ssub.s32 1, %s6
  %s9 = scalar_select 0, %s8, %s6
  %v10 = vstv %s4
  %11 = vst [vmem:[#allocation2] sm:$0x1] %v10
  // Predicated region
  $region2: #{forward.6} parent=0 // pred_check
    _
  $region3: #{forward.6} parent=0 // pred_check_branch
    %13 = sbr.rel (0) target = $region5
  $region4: #{forward.6} parent=0 // pred_region
    _
  $region5: #{forward.6} parent=0 // pred_fallthru
    _
  // Predicated region
  $region6: #{forward.6} parent=0 // pred_check
    _
  $region7: #{forward.6} parent=0 // pred_check_branch
    %15 = sbr.rel (0) target = $region9
  $region8: #{forward.6} parent=0 // pred_region
    _
  $region9: #{forward.6} parent=0 // pred_fallthru
    _
  // Predicated region
  $region10: #{forward.6} parent=0 // pred_check
    _
  $region11: #{forward.6} parent=0 // pred_check_branch
    %17 = sbr.rel (0) target = $region13
  $region12: #{forward.6} parent=0 // pred_region
    _
  $region13: #{forward.6} parent=0 // pred_fallthru
    _
  // Predicated region
  $region14: #{forward.6} parent=0 // pred_check
    _
  $region15: #{forward.6} parent=0 // pred_check_branch
    %19 = sbr.rel (0) target = $region17
  $region16: #{forward.6} parent=0 // pred_region
    _
  $region17: #{forward.6} parent=0 // pred_fallthru
    _
  // Predicated region
  $region18: #{forward.6} parent=0 // pred_check
    _
  $region19: #{forward.6} parent=0 // pred_check_branch
    %21 = sbr.rel (0) target = $region21
  $region20: #{forward.6} parent=0 // pred_region
    _
  $region21: #{forward.6} parent=0 // pred_fallthru
    _
  %v22 = vld [vmem:[%s1] sm:$0xff]
  %v23 = vld [vmem:[%s1 + $0x8] sm:$0xff]
  %v24 = vld [vmem:[%s0] sm:$0xf]
  %v25 = vld [vmem:[%s0 + $0x4] sm:$0xf]
  %v26 = vld [vmem:[%s0 + $0x8] sm:$0xf]
  %v27 = vld [vmem:[%s0 + $0xc] sm:$0xf]
  %v28 = vld [vmem:[%s0 + $0x10] sm:$0xf]
  %v29 = vld [vmem:[%s0 + $0x14] sm:$0xf]
  %v30 = vld [vmem:[%s0 + $0x18] sm:$0xf]
  %v31 = vld [vmem:[%s0 + $0x1c] sm:$0xf]
  %v32 = vld [vmem:[%s0 + $0x20] sm:$0xf]
  %v33 = vld [vmem:[%s0 + $0x24] sm:$0xf]
  %v34 = vld [vmem:[%s0 + $0x28] sm:$0xf]
  %v35 = vld [vmem:[%s0 + $0x2c] sm:$0xf]
  %v36 = vld [vmem:[%s0 + $0x30] sm:$0xf]
  %v37 = vld [vmem:[%s0 + $0x34] sm:$0xf]
  %v38 = vld [vmem:[%s0 + $0x38] sm:$0xf]
  %v39 = vld [vmem:[%s0 + $0x3c] sm:$0xf]
  %v40 = vld [vmem:[%s0 + $0x40] sm:$0xf]
  %v41 = vld [vmem:[%s0 + $0x44] sm:$0xf]
  %v42 = vld [vmem:[%s0 + $0x48] sm:$0xf]
  %v43 = vld [vmem:[%s0 + $0x4c] sm:$0xf]
  %v44 = vld [vmem:[%s0 + $0x50] sm:$0xf]
  %v45 = vld [vmem:[%s0 + $0x54] sm:$0xf]
  %v46 = vld [vmem:[%s0 + $0x58] sm:$0xf]
  %v47 = vld [vmem:[%s0 + $0x5c] sm:$0xf]
  %v48 = vld [vmem:[%s0 + $0x60] sm:$0xf]
  %v49 = vld [vmem:[%s0 + $0x64] sm:$0xf]
  %v50 = vld [vmem:[%s0 + $0x68] sm:$0xf]
  %v51 = vld [vmem:[%s0 + $0x6c] sm:$0xf]
  %v52 = vld [vmem:[%s0 + $0x70] sm:$0xf]
  %v53 = vld [vmem:[%s0 + $0x74] sm:$0xf]
  %v54 = vld [vmem:[%s0 + $0x78] sm:$0xf]
  %v55 = vld [vmem:[%s0 + $0x7c] sm:$0xf]
  %v56 = vld [vmem:[%s2] sm:$0xff]
  %v57 = vld [vmem:[%s2 + $0x8] sm:$0xff]
  %59 = vset.pattern.permute.xlu0 0
  %60 = vperm.xlu0 %59, %v56
  %v61 = vpop.permute.xlu0 %60
  %64 = vset.pattern.permute.xlu0 0
  %65 = vperm.xlu0 %64, %v57
  %v66 = vpop.permute.xlu0 %65
  %v70 = vunpack.c.l.b16 %v22
  %v71 = vunpack.c.h.b16 %v22
  %v72 = vunpack.c.l.b16 %v23
  %v73 = vunpack.c.h.b16 %v23
  %v74 = vpack.c.b16 %v72, %v70
  %v75 = vpack.c.b16 %v73, %v71
  %v110 = vunpack.c.l.b16 %v24
  %v111 = vunpack.c.l.b16 %v25
  %v112 = vunpack.c.l.b16 %v26
  %v113 = vunpack.c.l.b16 %v27
  %v114 = vunpack.c.l.b16 %v28
  %v115 = vunpack.c.l.b16 %v29
  %v116 = vunpack.c.l.b16 %v30
  %v117 = vunpack.c.l.b16 %v31
  %v118 = vunpack.c.l.b16 %v32
  %v119 = vunpack.c.l.b16 %v33
  %v120 = vunpack.c.l.b16 %v34
  %v121 = vunpack.c.l.b16 %v35
  %v122 = vunpack.c.l.b16 %v36
  %v123 = vunpack.c.l.b16 %v37
  %v124 = vunpack.c.l.b16 %v38
  %v125 = vunpack.c.l.b16 %v39
  %v126 = vunpack.c.l.b16 %v40
  %v127 = vunpack.c.l.b16 %v41
  %v128 = vunpack.c.l.b16 %v42
  %v129 = vunpack.c.l.b16 %v43
  %v130 = vunpack.c.l.b16 %v44
  %v131 = vunpack.c.l.b16 %v45
  %v132 = vunpack.c.l.b16 %v46
  %v133 = vunpack.c.l.b16 %v47
  %v134 = vunpack.c.l.b16 %v48
  %v135 = vunpack.c.l.b16 %v49
  %v136 = vunpack.c.l.b16 %v50
  %v137 = vunpack.c.l.b16 %v51
  %v138 = vunpack.c.l.b16 %v52
  %v139 = vunpack.c.l.b16 %v53
  %v140 = vunpack.c.l.b16 %v54
  %v141 = vunpack.c.l.b16 %v55
  %v142 = vpack.c.b16 %v111, %v110
  %v143 = vpack.c.b16 %v113, %v112
  %v144 = vpack.c.b16 %v115, %v114
  %v145 = vpack.c.b16 %v117, %v116
  %v146 = vpack.c.b16 %v119, %v118
  %v147 = vpack.c.b16 %v121, %v120
  %v148 = vpack.c.b16 %v123, %v122
  %v149 = vpack.c.b16 %v125, %v124
  %v150 = vpack.c.b16 %v127, %v126
  %v151 = vpack.c.b16 %v129, %v128
  %v152 = vpack.c.b16 %v131, %v130
  %v153 = vpack.c.b16 %v133, %v132
  %v154 = vpack.c.b16 %v135, %v134
  %v155 = vpack.c.b16 %v137, %v136
  %v156 = vpack.c.b16 %v139, %v138
  %v157 = vpack.c.b16 %v141, %v140
  %174 = vmatpush.bf16.msra.mxu0 %v149
  %175 = vmatpush.bf16.msra.mxu0 %v148
  %176 = vmatpush.bf16.msra.mxu0 %v147
  %177 = vmatpush.bf16.msra.mxu0 %v146
  %178 = vmatpush.bf16.msra.mxu0 %v145
  %179 = vmatpush.bf16.msra.mxu0 %v144
  %180 = vmatpush.bf16.msra.mxu0 %v143
  %181 = vmatpush.bf16.msra.mxu0 %v142
  %182 = vmatmul.bf16.gmra.mxu0 %v74
  %v183 = vpop.f32.mrf.mxu0
  %v184 = vadd.f32 %v61, %v183
  %v185 = vpop.f32.mrf.mxu0
  %v186 = vadd.f32 %v66, %v185
  %187 = vdwg.mxu0
  %188 = vmatpush.bf16.msra.mxu0 %v157
  %189 = vmatpush.bf16.msra.mxu0 %v156
  %190 = vmatpush.bf16.msra.mxu0 %v155
  %191 = vmatpush.bf16.msra.mxu0 %v154
  %192 = vmatpush.bf16.msra.mxu0 %v153
  %193 = vmatpush.bf16.msra.mxu0 %v152
  %194 = vmatpush.bf16.msra.mxu0 %v151
  %195 = vmatpush.bf16.msra.mxu0 %v150
  %196 = vmatmul.bf16.gmra.mxu0 %v75
  %v197 = vpop.f32.mrf.mxu0
  %v198 = vadd.f32 %v184, %v197
  %v199 = vpop.f32.mrf.mxu0
  %v200 = vadd.f32 %v186, %v199
  %201 = vdwg.mxu0
  %vm202 = vcmp.gt.f32.partialorder %v198, 0.0
  %vm203 = vcmp.gt.f32.partialorder %v200, 0.0
  %v204 = vmul.f32 %v198, 0.2
  %v205 = vmul.f32 %v200, 0.2
  %v206 = vsel %vm202, %v198, %v204
  %v207 = vsel %vm203, %v200, %v205
  %v208 = vld [vmem:[%s3] sm:$0xff]
  %v209 = vld [vmem:[%s3 + $0x8] sm:$0xff]
  %211 = vset.pattern.permute.xlu0 0
  %212 = vperm.xlu0 %211, %v208
  %v213 = vpop.permute.xlu0 %212
  %216 = vset.pattern.permute.xlu0 0
  %217 = vperm.xlu0 %216, %v209
  %v218 = vpop.permute.xlu0 %217
  %v220 = vmul.f32 %v213, %v206
  %v221 = vmul.f32 %v218, %v207
  %vm222 = vcmask 261120
  %v223 = vsel %vm222, %v220, 0.0
  %v224 = vsel %vm222, %v221, 0.0
  %v225 = vadd.f32 %v223, %v224
  %v226 = vrot.slane %v225, 4
  %v227 = vadd.f32 %v225, %v226
  %v228 = vrot.slane %v227, 2
  %v229 = vadd.f32 %v227, %v228
  %v230 = vrot.slane %v229, 1
  %v231 = vadd.f32 %v229, %v230
  %v232 = vld [vmem:[#allocation2] sm:$0x1]
  %234 = vset.pattern.permute.xlu0 0
  %235 = vperm.xlu0 %234, %v232
  %v236 = vpop.permute.xlu0 %235
  %v238 = vperm.slane %v236, 0
  %v239 = vadd.f32 %v231, %v238
  %vm240 = vcmask 253952
  %241 = vst.msk [vmem:[%s5] sm:$0x1] %vm240, %v239
  // Predicated region
  $region22: #{forward.6} parent=0 // pred_check
    _
  $region23: #{forward.6} parent=0 // pred_check_branch
    %243 = sbr.rel (0) target = $region25
  $region24: #{forward.6} parent=0 // pred_region
    _
  $region25: #{forward.6} parent=0 // pred_fallthru
    _
  // Predicated region
  $region26: #{forward.6} parent=0 // pred_check
    _
  $region27: #{forward.6} parent=0 // pred_check_branch
    %245 = sbr.rel (0) target = $region29
  $region28: #{forward.6} parent=0 // pred_region
    _
  $region29: #{forward.6} parent=0 // pred_fallthru
    _

// kernel: forward.7
$region0: #{forward.7}
  #allocation0 [shape = 'u32[]', space=smem, size = 0x4, offset = 0x4, fixed_abs, tag = 'smem constant byte address 0x4 - core index']
  #allocation1 [shape = 'u32[72,128]{1,0:T(1,128)}', space=vmem, size = 0x9000, scoped, tag = 'internal scratch']
  %s0 = inlined_call_operand.vmem [shape: f32[9,4,128], index: 0, kind: input, shape index: {}]
  %s1 = inlined_call_operand.vmem [shape: f32[1,128], index: 1, kind: input, shape index: {}]
  %s2 = inlined_call_operand.vmem [shape: f32[4,128], index: 2, kind: output, shape index: {}]
  %s3 = sld [smem:[#allocation0]]
  $region18: #{forward.7} parent=0
    _
  %s5 = ssub.s32 1, %s3
  %s6 = scalar_select 0, %s5, %s3
  // Predicated region
  $region2: #{forward.7} parent=0 // pred_check
    _
  $region3: #{forward.7} parent=0 // pred_check_branch
    %8 = sbr.rel (0) target = $region5
  $region4: #{forward.7} parent=0 // pred_region
    _
  $region5: #{forward.7} parent=0 // pred_fallthru
    _
  // Predicated region
  $region6: #{forward.7} parent=0 // pred_check
    _
  $region7: #{forward.7} parent=0 // pred_check_branch
    %10 = sbr.rel (0) target = $region9
  $region8: #{forward.7} parent=0 // pred_region
    _
  $region9: #{forward.7} parent=0 // pred_fallthru
    _
  %v11 = vld [vmem:[%s0] sm:$0xf]
  %s12 = scalar_lea.vmem %s0, 4
  %v13 = vld [vmem:[%s12] sm:$0xf]
  %v14 = vadd.f32 %v11, %v13
  %s15 = scalar_lea.vmem %s0, 8
  %v16 = vld [vmem:[%s15] sm:$0xf]
  %v17 = vadd.f32 %v14, %v16
  %s18 = scalar_lea.vmem %s0, 12
  %v19 = vld [vmem:[%s18] sm:$0xf]
  %v20 = vadd.f32 %v17, %v19
  %s21 = scalar_lea.vmem %s0, 16
  %v22 = vld [vmem:[%s21] sm:$0xf]
  %v23 = vadd.f32 %v20, %v22
  %s24 = scalar_lea.vmem %s0, 20
  %v25 = vld [vmem:[%s24] sm:$0xf]
  %v26 = vadd.f32 %v23, %v25
  %s27 = scalar_lea.vmem %s0, 24
  %v28 = vld [vmem:[%s27] sm:$0xf]
  %v29 = vadd.f32 %v26, %v28
  %s30 = scalar_lea.vmem %s0, 28
  %v31 = vld [vmem:[%s30] sm:$0xf]
  %v32 = vadd.f32 %v29, %v31
  %s33 = scalar_lea.vmem %s0, 32
  %v34 = vld [vmem:[%s33] sm:$0xf]
  %v35 = vadd.f32 %v32, %v34
  %v36 = vld [vmem:[%s1] sm:$0x1]
  %v38 = vperm.slane %v36, 0
  %v40 = vmul.f32 %v35, %v38
  %41 = vst [vmem:[%s2] sm:$0xf] %v40
  // Predicated region
  $region10: #{forward.7} parent=0 // pred_check
    _
  $region11: #{forward.7} parent=0 // pred_check_branch
    %43 = sbr.rel (0) target = $region13
  $region12: #{forward.7} parent=0 // pred_region
    _
  $region13: #{forward.7} parent=0 // pred_fallthru
    _
  // Predicated region
  $region14: #{forward.7} parent=0 // pred_check
    _
  $region15: #{forward.7} parent=0 // pred_check_branch
    %45 = sbr.rel (0) target = $region17
  $region16: #{forward.7} parent=0 // pred_region
    _
  $region17: #{forward.7} parent=0 // pred_fallthru
    _

// kernel: forward.8
$region0: #{forward.8}
  #allocation0 [shape = 'u32[]', space=smem, size = 0x4, offset = 0x4, fixed_abs, tag = 'smem constant byte address 0x4 - core index']
  #allocation1 [shape = 'u32[72,128]{1,0:T(1,128)}', space=vmem, size = 0x9000, scoped, tag = 'internal scratch']
  %s0 = inlined_call_operand.vmem [shape: bf16[256,32], index: 0, kind: input, shape index: {}]
  %s1 = inlined_call_operand.vmem [shape: bf16[8,256], index: 1, kind: input, shape index: {}]
  %s2 = inlined_call_operand.vmem [shape: f32[8,1], index: 2, kind: input, shape index: {}]
  %s3 = inlined_call_operand.vmem [shape: f32[8,32], index: 3, kind: output, shape index: {}]
  %s4 = sld [smem:[#allocation0]]
  $region22: #{forward.8} parent=0
    _
  %s6 = ssub.s32 1, %s4
  %s7 = scalar_select 0, %s6, %s4
  // Predicated region
  $region2: #{forward.8} parent=0 // pred_check
    _
  $region3: #{forward.8} parent=0 // pred_check_branch
    %9 = sbr.rel (0) target = $region5
  $region4: #{forward.8} parent=0 // pred_region
    _
  $region5: #{forward.8} parent=0 // pred_fallthru
    _
  // Predicated region
  $region6: #{forward.8} parent=0 // pred_check
    _
  $region7: #{forward.8} parent=0 // pred_check_branch
    %11 = sbr.rel (0) target = $region9
  $region8: #{forward.8} parent=0 // pred_region
    _
  $region9: #{forward.8} parent=0 // pred_fallthru
    _
  // Predicated region
  $region10: #{forward.8} parent=0 // pred_check
    _
  $region11: #{forward.8} parent=0 // pred_check_branch
    %13 = sbr.rel (0) target = $region13
  $region12: #{forward.8} parent=0 // pred_region
    _
  $region13: #{forward.8} parent=0 // pred_fallthru
    _
  %v14 = vld [vmem:[%s1] sm:$0xff]
  %v15 = vld [vmem:[%s0] sm:$0xf]
  %v16 = vld [vmem:[%s0 + $0x4] sm:$0xf]
  %v17 = vld [vmem:[%s0 + $0x8] sm:$0xf]
  %v18 = vld [vmem:[%s0 + $0xc] sm:$0xf]
  %v19 = vld [vmem:[%s0 + $0x10] sm:$0xf]
  %v20 = vld [vmem:[%s0 + $0x14] sm:$0xf]
  %v21 = vld [vmem:[%s0 + $0x18] sm:$0xf]
  %v22 = vld [vmem:[%s0 + $0x1c] sm:$0xf]
  %v23 = vld [vmem:[%s0 + $0x20] sm:$0xf]
  %v24 = vld [vmem:[%s0 + $0x24] sm:$0xf]
  %v25 = vld [vmem:[%s0 + $0x28] sm:$0xf]
  %v26 = vld [vmem:[%s0 + $0x2c] sm:$0xf]
  %v27 = vld [vmem:[%s0 + $0x30] sm:$0xf]
  %v28 = vld [vmem:[%s0 + $0x34] sm:$0xf]
  %v29 = vld [vmem:[%s0 + $0x38] sm:$0xf]
  %v30 = vld [vmem:[%s0 + $0x3c] sm:$0xf]
  %v31 = vld [vmem:[%s0 + $0x40] sm:$0xf]
  %v32 = vld [vmem:[%s0 + $0x44] sm:$0xf]
  %v33 = vld [vmem:[%s0 + $0x48] sm:$0xf]
  %v34 = vld [vmem:[%s0 + $0x4c] sm:$0xf]
  %v35 = vld [vmem:[%s0 + $0x50] sm:$0xf]
  %v36 = vld [vmem:[%s0 + $0x54] sm:$0xf]
  %v37 = vld [vmem:[%s0 + $0x58] sm:$0xf]
  %v38 = vld [vmem:[%s0 + $0x5c] sm:$0xf]
  %v39 = vld [vmem:[%s0 + $0x60] sm:$0xf]
  %v40 = vld [vmem:[%s0 + $0x64] sm:$0xf]
  %v41 = vld [vmem:[%s0 + $0x68] sm:$0xf]
  %v42 = vld [vmem:[%s0 + $0x6c] sm:$0xf]
  %v43 = vld [vmem:[%s0 + $0x70] sm:$0xf]
  %v44 = vld [vmem:[%s0 + $0x74] sm:$0xf]
  %v45 = vld [vmem:[%s0 + $0x78] sm:$0xf]
  %v46 = vld [vmem:[%s0 + $0x7c] sm:$0xf]
  %v47 = vld [vmem:[%s2] sm:$0xff]
  %49 = vset.pattern.permute.xlu0 0
  %50 = vperm.xlu0 %49, %v47
  %v51 = vpop.permute.xlu0 %50
  %v54 = vunpack.c.l.b16 %v14
  %v55 = vunpack.c.h.b16 %v14
  %v56 = vpack.c.b16 %v54, %v54
  %v57 = vpack.c.b16 %v55, %v55
  %v92 = vunpack.c.l.b16 %v15
  %v93 = vunpack.c.l.b16 %v16
  %v94 = vunpack.c.l.b16 %v17
  %v95 = vunpack.c.l.b16 %v18
  %v96 = vunpack.c.l.b16 %v19
  %v97 = vunpack.c.l.b16 %v20
  %v98 = vunpack.c.l.b16 %v21
  %v99 = vunpack.c.l.b16 %v22
  %v100 = vunpack.c.l.b16 %v23
  %v101 = vunpack.c.l.b16 %v24
  %v102 = vunpack.c.l.b16 %v25
  %v103 = vunpack.c.l.b16 %v26
  %v104 = vunpack.c.l.b16 %v27
  %v105 = vunpack.c.l.b16 %v28
  %v106 = vunpack.c.l.b16 %v29
  %v107 = vunpack.c.l.b16 %v30
  %v108 = vunpack.c.l.b16 %v31
  %v109 = vunpack.c.l.b16 %v32
  %v110 = vunpack.c.l.b16 %v33
  %v111 = vunpack.c.l.b16 %v34
  %v112 = vunpack.c.l.b16 %v35
  %v113 = vunpack.c.l.b16 %v36
  %v114 = vunpack.c.l.b16 %v37
  %v115 = vunpack.c.l.b16 %v38
  %v116 = vunpack.c.l.b16 %v39
  %v117 = vunpack.c.l.b16 %v40
  %v118 = vunpack.c.l.b16 %v41
  %v119 = vunpack.c.l.b16 %v42
  %v120 = vunpack.c.l.b16 %v43
  %v121 = vunpack.c.l.b16 %v44
  %v122 = vunpack.c.l.b16 %v45
  %v123 = vunpack.c.l.b16 %v46
  %v124 = vpack.c.b16 %v93, %v92
  %v125 = vpack.c.b16 %v95, %v94
  %v126 = vpack.c.b16 %v97, %v96
  %v127 = vpack.c.b16 %v99, %v98
  %v128 = vpack.c.b16 %v101, %v100
  %v129 = vpack.c.b16 %v103, %v102
  %v130 = vpack.c.b16 %v105, %v104
  %v131 = vpack.c.b16 %v107, %v106
  %v132 = vpack.c.b16 %v109, %v108
  %v133 = vpack.c.b16 %v111, %v110
  %v134 = vpack.c.b16 %v113, %v112
  %v135 = vpack.c.b16 %v115, %v114
  %v136 = vpack.c.b16 %v117, %v116
  %v137 = vpack.c.b16 %v119, %v118
  %v138 = vpack.c.b16 %v121, %v120
  %v139 = vpack.c.b16 %v123, %v122
  %156 = vmatpush.bf16.msra.mxu0 %v131
  %157 = vmatpush.bf16.msra.mxu0 %v130
  %158 = vmatpush.bf16.msra.mxu0 %v129
  %159 = vmatpush.bf16.msra.mxu0 %v128
  %160 = vmatpush.bf16.msra.mxu0 %v127
  %161 = vmatpush.bf16.msra.mxu0 %v126
  %162 = vmatpush.bf16.msra.mxu0 %v125
  %163 = vmatpush.bf16.msra.mxu0 %v124
  %164 = vmatmul.bf16.gmra.mxu0 %v56
  %v165 = vpop.f32.mrf.mxu0
  %v166 = vadd.f32 %v51, %v165
  %v167 = vpop.f32.mrf.mxu0
  %168 = vdwg.mxu0
  %169 = vmatpush.bf16.msra.mxu0 %v139
  %170 = vmatpush.bf16.msra.mxu0 %v138
  %171 = vmatpush.bf16.msra.mxu0 %v137
  %172 = vmatpush.bf16.msra.mxu0 %v136
  %173 = vmatpush.bf16.msra.mxu0 %v135
  %174 = vmatpush.bf16.msra.mxu0 %v134
  %175 = vmatpush.bf16.msra.mxu0 %v133
  %176 = vmatpush.bf16.msra.mxu0 %v132
  %177 = vmatmul.bf16.gmra.mxu0 %v57
  %v178 = vpop.f32.mrf.mxu0
  %v179 = vadd.f32 %v166, %v178
  %v180 = vpop.f32.mrf.mxu0
  %181 = vdwg.mxu0
  %vm182 = vcmp.gt.f32.partialorder %v179, 0.0
  %v183 = vmul.f32 %v179, 0.2
  %v184 = vsel %vm182, %v179, %v183
  %vm185 = vcmask 261120
  %186 = vst.msk [vmem:[%s3] sm:$0xff] %vm185, %v184
  // Predicated region
  $region14: #{forward.8} parent=0 // pred_check
    _
  $region15: #{forward.8} parent=0 // pred_check_branch
    %188 = sbr.rel (0) target = $region17
  $region16: #{forward.8} parent=0 // pred_region
    _
  $region17: #{forward.8} parent=0 // pred_fallthru
    _
  // Predicated region
  $region18: #{forward.8} parent=0 // pred_check
    _
  $region19: #{forward.8} parent=0 // pred_check_branch
    %190 = sbr.rel (0) target = $region21
  $region20: #{forward.8} parent=0 // pred_region
    _
  $region21: #{forward.8} parent=0 // pred_fallthru
    _

// kernel: forward.9
$region0: #{forward.9}
  #allocation0 [shape = 'u32[]', space=smem, size = 0x4, offset = 0x4, fixed_abs, tag = 'smem constant byte address 0x4 - core index']
  #allocation1 [shape = 'u32[72,128]{1,0:T(1,128)}', space=vmem, size = 0x9000, scoped, tag = 'internal scratch']
  #allocation2 [shape = 'f32[1,1]{1,0:T(1,128)S(1)}', space=vmem, size = 0x200, scoped, tag = 'scoped memory for forward.9']
  %s0 = inlined_call_operand.vmem [shape: bf16[256,8], index: 0, kind: input, shape index: {}]
  %s1 = inlined_call_operand.vmem [shape: bf16[16,256], index: 1, kind: input, shape index: {}]
  %s2 = inlined_call_operand.vmem [shape: f32[16,1], index: 2, kind: input, shape index: {}]
  %s3 = inlined_call_operand.vmem [shape: f32[16,1], index: 3, kind: input, shape index: {}]
  %s4 = inlined_call_operand.<no memory space> [shape: f32[1,1], index: 4, kind: input, shape index: {}]
  %s5 = inlined_call_operand.vmem [shape: f32[1,8], index: 5, kind: output, shape index: {}]
  %s6 = sld [smem:[#allocation0]]
  $region30: #{forward.9} parent=0
    _
  %s8 = ssub.s32 1, %s6
  %s9 = scalar_select 0, %s8, %s6
  %v10 = vstv %s4
  %11 = vst [vmem:[#allocation2] sm:$0x1] %v10
  // Predicated region
  $region2: #{forward.9} parent=0 // pred_check
    _
  $region3: #{forward.9} parent=0 // pred_check_branch
    %13 = sbr.rel (0) target = $region5
  $region4: #{forward.9} parent=0 // pred_region
    _
  $region5: #{forward.9} parent=0 // pred_fallthru
    _
  // Predicated region
  $region6: #{forward.9} parent=0 // pred_check
    _
  $region7: #{forward.9} parent=0 // pred_check_branch
    %15 = sbr.rel (0) target = $region9
  $region8: #{forward.9} parent=0 // pred_region
    _
  $region9: #{forward.9} parent=0 // pred_fallthru
    _
  // Predicated region
  $region10: #{forward.9} parent=0 // pred_check
    _
  $region11: #{forward.9} parent=0 // pred_check_branch
    %17 = sbr.rel (0) target = $region13
  $region12: #{forward.9} parent=0 // pred_region
    _
  $region13: #{forward.9} parent=0 // pred_fallthru
    _
  // Predicated region
  $region14: #{forward.9} parent=0 // pred_check
    _
  $region15: #{forward.9} parent=0 // pred_check_branch
    %19 = sbr.rel (0) target = $region17
  $region16: #{forward.9} parent=0 // pred_region
    _
  $region17: #{forward.9} parent=0 // pred_fallthru
    _
  // Predicated region
  $region18: #{forward.9} parent=0 // pred_check
    _
  $region19: #{forward.9} parent=0 // pred_check_branch
    %21 = sbr.rel (0) target = $region21
  $region20: #{forward.9} parent=0 // pred_region
    _
  $region21: #{forward.9} parent=0 // pred_fallthru
    _
  %v22 = vld [vmem:[%s1] sm:$0xff]
  %v23 = vld [vmem:[%s1 + $0x8] sm:$0xff]
  %v24 = vld [vmem:[%s0] sm:$0xf]
  %v25 = vld [vmem:[%s0 + $0x4] sm:$0xf]
  %v26 = vld [vmem:[%s0 + $0x8] sm:$0xf]
  %v27 = vld [vmem:[%s0 + $0xc] sm:$0xf]
  %v28 = vld [vmem:[%s0 + $0x10] sm:$0xf]
  %v29 = vld [vmem:[%s0 + $0x14] sm:$0xf]
  %v30 = vld [vmem:[%s0 + $0x18] sm:$0xf]
  %v31 = vld [vmem:[%s0 + $0x1c] sm:$0xf]
  %v32 = vld [vmem:[%s0 + $0x20] sm:$0xf]
  %v33 = vld [vmem:[%s0 + $0x24] sm:$0xf]
  %v34 = vld [vmem:[%s0 + $0x28] sm:$0xf]
  %v35 = vld [vmem:[%s0 + $0x2c] sm:$0xf]
  %v36 = vld [vmem:[%s0 + $0x30] sm:$0xf]
  %v37 = vld [vmem:[%s0 + $0x34] sm:$0xf]
  %v38 = vld [vmem:[%s0 + $0x38] sm:$0xf]
  %v39 = vld [vmem:[%s0 + $0x3c] sm:$0xf]
  %v40 = vld [vmem:[%s0 + $0x40] sm:$0xf]
  %v41 = vld [vmem:[%s0 + $0x44] sm:$0xf]
  %v42 = vld [vmem:[%s0 + $0x48] sm:$0xf]
  %v43 = vld [vmem:[%s0 + $0x4c] sm:$0xf]
  %v44 = vld [vmem:[%s0 + $0x50] sm:$0xf]
  %v45 = vld [vmem:[%s0 + $0x54] sm:$0xf]
  %v46 = vld [vmem:[%s0 + $0x58] sm:$0xf]
  %v47 = vld [vmem:[%s0 + $0x5c] sm:$0xf]
  %v48 = vld [vmem:[%s0 + $0x60] sm:$0xf]
  %v49 = vld [vmem:[%s0 + $0x64] sm:$0xf]
  %v50 = vld [vmem:[%s0 + $0x68] sm:$0xf]
  %v51 = vld [vmem:[%s0 + $0x6c] sm:$0xf]
  %v52 = vld [vmem:[%s0 + $0x70] sm:$0xf]
  %v53 = vld [vmem:[%s0 + $0x74] sm:$0xf]
  %v54 = vld [vmem:[%s0 + $0x78] sm:$0xf]
  %v55 = vld [vmem:[%s0 + $0x7c] sm:$0xf]
  %v56 = vld [vmem:[%s2] sm:$0xff]
  %v57 = vld [vmem:[%s2 + $0x8] sm:$0xff]
  %59 = vset.pattern.permute.xlu0 0
  %60 = vperm.xlu0 %59, %v56
  %v61 = vpop.permute.xlu0 %60
  %64 = vset.pattern.permute.xlu0 0
  %65 = vperm.xlu0 %64, %v57
  %v66 = vpop.permute.xlu0 %65
  %v70 = vunpack.c.l.b16 %v22
  %v71 = vunpack.c.h.b16 %v22
  %v72 = vunpack.c.l.b16 %v23
  %v73 = vunpack.c.h.b16 %v23
  %v74 = vpack.c.b16 %v72, %v70
  %v75 = vpack.c.b16 %v73, %v71
  %v110 = vunpack.c.l.b16 %v24
  %v111 = vunpack.c.l.b16 %v25
  %v112 = vunpack.c.l.b16 %v26
  %v113 = vunpack.c.l.b16 %v27
  %v114 = vunpack.c.l.b16 %v28
  %v115 = vunpack.c.l.b16 %v29
  %v116 = vunpack.c.l.b16 %v30
  %v117 = vunpack.c.l.b16 %v31
  %v118 = vunpack.c.l.b16 %v32
  %v119 = vunpack.c.l.b16 %v33
  %v120 = vunpack.c.l.b16 %v34
  %v121 = vunpack.c.l.b16 %v35
  %v122 = vunpack.c.l.b16 %v36
  %v123 = vunpack.c.l.b16 %v37
  %v124 = vunpack.c.l.b16 %v38
  %v125 = vunpack.c.l.b16 %v39
  %v126 = vunpack.c.l.b16 %v40
  %v127 = vunpack.c.l.b16 %v41
  %v128 = vunpack.c.l.b16 %v42
  %v129 = vunpack.c.l.b16 %v43
  %v130 = vunpack.c.l.b16 %v44
  %v131 = vunpack.c.l.b16 %v45
  %v132 = vunpack.c.l.b16 %v46
  %v133 = vunpack.c.l.b16 %v47
  %v134 = vunpack.c.l.b16 %v48
  %v135 = vunpack.c.l.b16 %v49
  %v136 = vunpack.c.l.b16 %v50
  %v137 = vunpack.c.l.b16 %v51
  %v138 = vunpack.c.l.b16 %v52
  %v139 = vunpack.c.l.b16 %v53
  %v140 = vunpack.c.l.b16 %v54
  %v141 = vunpack.c.l.b16 %v55
  %v142 = vpack.c.b16 %v111, %v110
  %v143 = vpack.c.b16 %v113, %v112
  %v144 = vpack.c.b16 %v115, %v114
  %v145 = vpack.c.b16 %v117, %v116
  %v146 = vpack.c.b16 %v119, %v118
  %v147 = vpack.c.b16 %v121, %v120
  %v148 = vpack.c.b16 %v123, %v122
  %v149 = vpack.c.b16 %v125, %v124
  %v150 = vpack.c.b16 %v127, %v126
  %v151 = vpack.c.b16 %v129, %v128
  %v152 = vpack.c.b16 %v131, %v130
  %v153 = vpack.c.b16 %v133, %v132
  %v154 = vpack.c.b16 %v135, %v134
  %v155 = vpack.c.b16 %v137, %v136
  %v156 = vpack.c.b16 %v139, %v138
  %v157 = vpack.c.b16 %v141, %v140
  %174 = vmatpush.bf16.msra.mxu0 %v149
  %175 = vmatpush.bf16.msra.mxu0 %v148
  %176 = vmatpush.bf16.msra.mxu0 %v147
  %177 = vmatpush.bf16.msra.mxu0 %v146
  %178 = vmatpush.bf16.msra.mxu0 %v145
  %179 = vmatpush.bf16.msra.mxu0 %v144
  %180 = vmatpush.bf16.msra.mxu0 %v143
  %181 = vmatpush.bf16.msra.mxu0 %v142
  %182 = vmatmul.bf16.gmra.mxu0 %v74
  %v183 = vpop.f32.mrf.mxu0
  %v184 = vadd.f32 %v61, %v183
  %v185 = vpop.f32.mrf.mxu0
  %v186 = vadd.f32 %v66, %v185
  %187 = vdwg.mxu0
  %188 = vmatpush.bf16.msra.mxu0 %v157
  %189 = vmatpush.bf16.msra.mxu0 %v156
  %190 = vmatpush.bf16.msra.mxu0 %v155
  %191 = vmatpush.bf16.msra.mxu0 %v154
  %192 = vmatpush.bf16.msra.mxu0 %v153
  %193 = vmatpush.bf16.msra.mxu0 %v152
  %194 = vmatpush.bf16.msra.mxu0 %v151
  %195 = vmatpush.bf16.msra.mxu0 %v150
  %196 = vmatmul.bf16.gmra.mxu0 %v75
  %v197 = vpop.f32.mrf.mxu0
  %v198 = vadd.f32 %v184, %v197
  %v199 = vpop.f32.mrf.mxu0
  %v200 = vadd.f32 %v186, %v199
  %201 = vdwg.mxu0
  %vm202 = vcmp.gt.f32.partialorder %v198, 0.0
  %vm203 = vcmp.gt.f32.partialorder %v200, 0.0
  %v204 = vmul.f32 %v198, 0.2
  %v205 = vmul.f32 %v200, 0.2
  %v206 = vsel %vm202, %v198, %v204
  %v207 = vsel %vm203, %v200, %v205
  %v208 = vld [vmem:[%s3] sm:$0xff]
  %v209 = vld [vmem:[%s3 + $0x8] sm:$0xff]
  %211 = vset.pattern.permute.xlu0 0
  %212 = vperm.xlu0 %211, %v208
  %v213 = vpop.permute.xlu0 %212
  %216 = vset.pattern.permute.xlu0 0
  %217 = vperm.xlu0 %216, %v209
  %v218 = vpop.permute.xlu0 %217
  %v220 = vmul.f32 %v213, %v206
  %v221 = vmul.f32 %v218, %v207
  %vm222 = vcmask 64512
  %v223 = vsel %vm222, %v220, 0.0
  %v224 = vsel %vm222, %v221, 0.0
  %v225 = vadd.f32 %v223, %v224
  %v226 = vrot.slane %v225, 4
  %v227 = vadd.f32 %v225, %v226
  %v228 = vrot.slane %v227, 2
  %v229 = vadd.f32 %v227, %v228
  %v230 = vrot.slane %v229, 1
  %v231 = vadd.f32 %v229, %v230
  %v232 = vld [vmem:[#allocation2] sm:$0x1]
  %234 = vset.pattern.permute.xlu0 0
  %235 = vperm.xlu0 %234, %v232
  %v236 = vpop.permute.xlu0 %235
  %v238 = vperm.slane %v236, 0
  %v239 = vadd.f32 %v231, %v238
  %vm240 = vcmask 57344
  %241 = vst.msk [vmem:[%s5] sm:$0x1] %vm240, %v239
  // Predicated region
  $region22: #{forward.9} parent=0 // pred_check
    _
  $region23: #{forward.9} parent=0 // pred_check_branch
    %243 = sbr.rel (0) target = $region25
  $region24: #{forward.9} parent=0 // pred_region
    _
  $region25: #{forward.9} parent=0 // pred_fallthru
    _
  // Predicated region
  $region26: #{forward.9} parent=0 // pred_check
    _
  $region27: #{forward.9} parent=0 // pred_check_branch
    %245 = sbr.rel (0) target = $region29
  $region28: #{forward.9} parent=0 // pred_region
    _
  $region29: #{forward.9} parent=0 // pred_fallthru
    _

</llo_original>
